<compile_context>
chip_gen: v7x
topology: tpu7x:2x2x1
jax: 0.10.0
libtpu: 0.0.40
codegen_flags: <defaults>
</compile_context>

<pallas_src>
import functools

import jax
import jax.numpy as jnp
import numpy as np
from jax import lax
from jax.experimental import pallas as pl
from jax.experimental.pallas import tpu as pltpu


def _round_up(x, m):
    return ((x + m - 1) // m) * m


# ----------------------------------------------------------------------------
# Fused kernel: entire encoder + decoder in one invocation.
# ----------------------------------------------------------------------------
def _cae1d_fused_kernel(x_ref, w_ref, b_ref, o_ref, *, acts, K, pad, L, N, stride):
    """All Conv1d('same') (+ReLU) layers back to back, activations in vregs.

    Lane-dense layout: batch element n's sequence occupies lanes
    [n*stride, n*stride + L) of the W-lane slab (stride = L + pad); the pad
    lanes after each sequence and the 128-alignment tail are zero and provide
    the 'same' zero padding.  W is a multiple of 128, so all full-slab
    loads/stores are aligned; the only lane movement is pltpu.roll (XLU).

      x_ref : (CP, W)                lane-dense zero-padded input slab
      w_ref : (n_layers, CP, K*CP)   prepacked im2col weights, [l, o, t*CP+c] = w_l[o, c, t]
      b_ref : (n_layers, CP, 1)      prepacked biases (zero for padded channels)
      o_ref : (CP, W)                final conv output (lane dense)
    """
    n_layers = len(acts)
    W = o_ref.shape[-1]

    # Valid-lane mask: True at real sequence positions, False at the pad-wide
    # inter-sequence gaps and the alignment tail.  Re-zeroing those lanes
    # between layers keeps the implicit 'same' zero padding intact.
    lane = lax.broadcasted_iota(jnp.int32, (1, W), 1)
    valid = lane < 0                                    # all False
    for n in range(N):                                  # N is tiny and static
        valid = valid | ((lane >= n * stride) & (lane < n * stride + L))

    h = x_ref[...]                                      # (CP, W)
    for i in range(n_layers):                           # static unroll over layers
        # im2col via XLU rolls: row block t of `cols` is h shifted by (t - pad)
        # lanes.  Wrap-around lanes land in the zero tail, so they are harmless.
        taps = [h if t == pad else pltpu.roll(h, (pad - t) % W, 1) for t in range(K)]
        cols = jnp.concatenate(taps, axis=0)            # (K*CP, W)

        # One MXU push per layer.  Default f32 matmul precision matches the
        # lax.conv reference to ~1e-4 at this 24-wide contraction.
        y = jnp.dot(w_ref[i], cols, preferred_element_type=jnp.float32) + b_ref[i]
        if acts[i]:
            y = jnp.maximum(y, 0.0)                     # activation_fn = ReLU

        if i < n_layers - 1:
            # Single full-width masked update: gap/tail lanes stay exactly zero
            # (the padding invariant); the select rides free VPU slack.
            h = jnp.where(valid, y, 0.0)
        else:
            o_ref[...] = y.astype(o_ref.dtype)          # one 128-aligned lane-dense store


# ----------------------------------------------------------------------------
# One-time parameter packing (hoisted out of the per-call path).
# ----------------------------------------------------------------------------
def pack_cae1d_params(params, kernel_size):
    """Pack (encoder, decoder) Conv1d params once into MXU-friendly slabs."""
    enc_params, dec_params = params
    layers = list(enc_params) + list(dec_params)
    K = kernel_size
    assert K % 2 == 1, "Conv1d 'same' padding requires odd kernel_size"
    pad = (K - 1) // 2
    n_layers = len(layers)
    # Channels zero-padded to a sublane multiple so every layer shares one shape.
    CP = _round_up(max(max(w.shape[0], w.shape[1]) for w, _ in layers), 8)

    w_all = np.zeros((n_layers, CP, K * CP), np.float32)
    b_all = np.zeros((n_layers, CP, 1), np.float32)
    for i, (w, b) in enumerate(layers):
        w_np = np.asarray(w, np.float32)
        b_np = np.asarray(b, np.float32)
        c_out, c_in, _ = w_np.shape
        for t in range(K):                  # im2col column t*CP + c holds w[:, c, t]
            w_all[i, :c_out, t * CP:t * CP + c_in] = w_np[:, :, t]
        b_all[i, :c_out, 0] = b_np

    # ReLU after every conv (incl. the latent conv) except the final decoder conv.
    acts = tuple([True] * (n_layers - 1) + [False])
    meta = dict(acts=acts, K=K, pad=pad, CP=CP,
                c_out_final=layers[-1][0].shape[0])
    return jnp.asarray(w_all), jnp.asarray(b_all), meta


# ----------------------------------------------------------------------------
# Forward wrapper: layout plumbing + one pallas_call.
# ----------------------------------------------------------------------------
def cae1d_forward(x, w_all, b_all, *, meta):
    """CAE1D_PyTorch.forward (encoder -> decoder) via one fused Pallas kernel."""
    acts, K, pad, CP = meta["acts"], meta["K"], meta["pad"], meta["CP"]
    c_out_final = meta["c_out_final"]
    n_layers = len(acts)

    N, C0, L = x.shape
    stride = L + pad                          # per-sequence lane stride (data + zero gap)
    W = _round_up(N * stride, 128)            # lane-dense slab width (128-aligned)

    # Stage x into the lane-dense, zero-padded slab (pure XLA layout plumbing).
    xt = jnp.transpose(x.astype(jnp.float32), (1, 0, 2))           # (C0, N, L)
    xt = jnp.pad(xt, ((0, CP - C0), (0, 0), (0, stride - L)))      # (CP, N, stride)
    x_slab = jnp.pad(xt.reshape(CP, N * stride),
                     ((0, 0), (0, W - N * stride)))                # (CP, W)

    kernel = functools.partial(
        _cae1d_fused_kernel, acts=acts, K=K, pad=pad, L=L, N=N, stride=stride)

    out2d = pl.pallas_call(
        kernel,
        out_shape=jax.ShapeDtypeStruct((CP, W), jnp.float32),
        grid=(1,),                            # whole (tiny) problem in one grid point
        in_specs=[
            pl.BlockSpec((CP, W), lambda i: (0, 0)),
            pl.BlockSpec((n_layers, CP, K * CP), lambda i: (0, 0, 0)),
            pl.BlockSpec((n_layers, CP, 1), lambda i: (0, 0, 0)),
        ],
        out_specs=pl.BlockSpec((CP, W), lambda i: (0, 0)),
        compiler_params=pltpu.CompilerParams(
            dimension_semantics=("arbitrary",)),
    )(x_slab, w_all, b_all)

    # Layout plumbing only: extract the valid (batch, channel, position) lanes.
    # (Gap/tail lanes of out2d hold bias values and must never be consumed raw.)
    out = out2d[:c_out_final, :N * stride].reshape(c_out_final, N, stride)[:, :, :L]
    return jnp.transpose(out, (1, 0, 2)).astype(x.dtype)


# ----------------------------------------------------------------------------
# Parameter construction (deterministic, PyTorch Conv1d-style uniform init)
# ----------------------------------------------------------------------------
def _init_conv(key, c_in, c_out, k):
    bound = 1.0 / np.sqrt(c_in * k)
    kw, kb = jax.random.split(key)
    w = jax.random.uniform(kw, (c_out, c_in, k), jnp.float32, -bound, bound)
    b = jax.random.uniform(kb, (c_out,), jnp.float32, -bound, bound)
    return w, b


def init_cae1d_params(key, input_features, latent_dim, conv_filters, kernel_size):
    keys = jax.random.split(key, 2 * (len(conv_filters) + 1) + 2)
    ki = iter(range(len(keys)))

    # Encoder: conv_filters[...] then latent_dim; every conv followed by ReLU.
    enc_params = []
    cur = input_features
    for f in conv_filters:
        enc_params.append(_init_conv(keys[next(ki)], cur, f, kernel_size))
        cur = f
    enc_params.append(_init_conv(keys[next(ki)], cur, latent_dim, kernel_size))

    # Decoder: reversed(conv_filters) then output_features; last conv has NO act.
    dec_params = []
    cur = latent_dim
    for f in reversed(conv_filters):
        dec_params.append(_init_conv(keys[next(ki)], cur, f, kernel_size))
        cur = f
    dec_params.append(_init_conv(keys[next(ki)], cur, input_features, kernel_size))
    return enc_params, dec_params


# ----------------------------------------------------------------------------
# Pure-JAX reference (lax.conv) for a correctness sanity check
# ----------------------------------------------------------------------------
def _conv_ref(x, w, b, apply_act):
    pad = (w.shape[-1] - 1) // 2
    y = lax.conv_general_dilated(
        x, w, window_strides=(1,), padding=[(pad, pad)],
        dimension_numbers=("NCH", "OIH", "NCH"),
    ) + b[None, :, None]
    return jnp.maximum(y, 0.0) if apply_act else y


def cae1d_ref(x, params):
    enc_params, dec_params = params
    h = x
    for w, b in enc_params:
        h = _conv_ref(h, w, b, True)
    n_dec = len(dec_params)
    for i, (w, b) in enumerate(dec_params):
        h = _conv_ref(h, w, b, i < n_dec - 1)
    return h


if __name__ == "__main__":
    # Small shapes consistent with the module: (batch, input_features, seq_len)
    batch, input_features, seq_len = 2, 4, 16
    latent_dim, conv_filters, kernel_size = 3, [8, 6], 3

    key = jax.random.PRNGKey(0)
    k_x, k_p = jax.random.split(key)
    x = jax.random.normal(k_x, (batch, input_features, seq_len), jnp.float32)
    params = init_cae1d_params(
        k_p, input_features, latent_dim, conv_filters, kernel_size
    )

    # Pack parameters ONCE (outside the per-call / jitted path).
    w_all, b_all, meta = pack_cae1d_params(params, kernel_size)

    fwd = jax.jit(functools.partial(cae1d_forward, meta=meta))
    out = jax.block_until_ready(fwd(x, w_all, b_all))

    ref = jax.block_until_ready(cae1d_ref(x, params))
    np.testing.assert_allclose(np.asarray(out), np.asarray(ref), rtol=1e-4, atol=1e-4)

    print("KERNEL_OK")
</pallas_src>

<mosaic_0001>
module attributes {stable_mosaic.version = 11 : i64} {
  func.func @_cae1d_fused_kernel(%arg0: i32, %arg1: memref<8x128xf32, #tpu.memory_space<vmem>>, %arg2: memref<6x8x24xf32, #tpu.memory_space<vmem>>, %arg3: memref<6x8x1xf32, #tpu.memory_space<vmem>>, %arg4: memref<8x128xf32, #tpu.memory_space<vmem>>) attributes {dimension_semantics = [#tpu.dimension_semantics<arbitrary>], iteration_bounds = array<i64: 1>, scalar_prefetch = 0 : i64, scratch_operands = 0 : i64, tpu.core_type = #tpu.core_type<tc>, window_params = [{pipeline_mode = #tpu.pipeline_mode<synchronous>, transform_indices = @transform_0, window_bounds = array<i64: 8, 128>}, {pipeline_mode = #tpu.pipeline_mode<synchronous>, transform_indices = @transform_1, window_bounds = array<i64: 6, 8, 24>}, {pipeline_mode = #tpu.pipeline_mode<synchronous>, transform_indices = @transform_2, window_bounds = array<i64: 6, 8, 1>}, {pipeline_mode = #tpu.pipeline_mode<synchronous>, transform_indices = @transform_3, window_bounds = array<i64: 8, 128>}]} {
    %0 = tpu.iota {dimensions = array<i32: 1>} : vector<1x128xi32>
    %c0_i32 = arith.constant 0 : i32
    %1 = vector.broadcast %c0_i32 : i32 to vector<1x128xi32>
    %2 = arith.cmpi slt, %0, %1 : vector<1x128xi32>
    %c0_i32_0 = arith.constant 0 : i32
    %3 = vector.broadcast %c0_i32_0 : i32 to vector<1x128xi32>
    %4 = arith.cmpi sge, %0, %3 : vector<1x128xi32>
    %c16_i32 = arith.constant 16 : i32
    %5 = vector.broadcast %c16_i32 : i32 to vector<1x128xi32>
    %6 = arith.cmpi slt, %0, %5 : vector<1x128xi32>
    %7 = arith.andi %4, %6 : vector<1x128xi1>
    %8 = arith.ori %2, %7 : vector<1x128xi1>
    %c17_i32 = arith.constant 17 : i32
    %9 = vector.broadcast %c17_i32 : i32 to vector<1x128xi32>
    %10 = arith.cmpi sge, %0, %9 : vector<1x128xi32>
    %c33_i32 = arith.constant 33 : i32
    %11 = vector.broadcast %c33_i32 : i32 to vector<1x128xi32>
    %12 = arith.cmpi slt, %0, %11 : vector<1x128xi32>
    %13 = arith.andi %10, %12 : vector<1x128xi1>
    %14 = arith.ori %8, %13 : vector<1x128xi1>
    %c0 = arith.constant 0 : index
    %c0_1 = arith.constant 0 : index
    %15 = vector.load %arg1[%c0, %c0_1] : memref<8x128xf32, #tpu.memory_space<vmem>>, vector<8x128xf32>
    %c1_i32 = arith.constant 1 : i32
    %16 = tpu.dynamic_rotate %15 by %c1_i32 dim 1 : vector<8x128xf32>, i32 -> vector<8x128xf32>
    %c127_i32 = arith.constant 127 : i32
    %17 = tpu.dynamic_rotate %15 by %c127_i32 dim 1 : vector<8x128xf32>, i32 -> vector<8x128xf32>
    %18 = tpu.concatenate %16, %15, %17 in 0 : vector<8x128xf32>, vector<8x128xf32>, vector<8x128xf32> -> vector<24x128xf32>
    %c0_2 = arith.constant 0 : index
    %c0_3 = arith.constant 0 : index
    %c0_4 = arith.constant 0 : index
    %19 = vector.load %arg2[%c0_2, %c0_3, %c0_4] : memref<6x8x24xf32, #tpu.memory_space<vmem>>, vector<1x8x24xf32>
    %20 = vector.shape_cast %19 : vector<1x8x24xf32> to vector<8x24xf32>
    %cst = arith.constant dense<0.000000e+00> : vector<8x128xf32>
    %21 = tpu.matmul %20, %18, %cst {dimension_numbers = #tpu.dot_dimension_numbers<[1], [0], [0], [1], [0, 0, 1, 1], [], []>} : vector<8x24xf32>, vector<24x128xf32>, vector<8x128xf32> -> vector<8x128xf32>
    %c0_5 = arith.constant 0 : index
    %c0_6 = arith.constant 0 : index
    %c0_7 = arith.constant 0 : index
    %22 = vector.load %arg3[%c0_5, %c0_6, %c0_7] : memref<6x8x1xf32, #tpu.memory_space<vmem>>, vector<1x8x1xf32>
    %23 = vector.shape_cast %22 : vector<1x8x1xf32> to vector<8x1xf32>
    %24 = vector.broadcast %23 : vector<8x1xf32> to vector<8x128xf32>
    %25 = arith.addf %21, %24 : vector<8x128xf32>
    %cst_8 = arith.constant 0.000000e+00 : f32
    %26 = vector.broadcast %cst_8 : f32 to vector<8x128xf32>
    %27 = arith.maximumf %25, %26 : vector<8x128xf32>
    %cst_9 = arith.constant 0.000000e+00 : f32
    %28 = vector.shape_cast %14 : vector<1x128xi1> to vector<1x128xi1>
    %29 = vector.broadcast %28 : vector<1x128xi1> to vector<8x128xi1>
    %30 = vector.broadcast %cst_9 : f32 to vector<8x128xf32>
    %31 = arith.select %29, %27, %30 : vector<8x128xi1>, vector<8x128xf32>
    %c1_i32_10 = arith.constant 1 : i32
    %32 = tpu.dynamic_rotate %31 by %c1_i32_10 dim 1 : vector<8x128xf32>, i32 -> vector<8x128xf32>
    %c127_i32_11 = arith.constant 127 : i32
    %33 = tpu.dynamic_rotate %31 by %c127_i32_11 dim 1 : vector<8x128xf32>, i32 -> vector<8x128xf32>
    %34 = tpu.concatenate %32, %31, %33 in 0 : vector<8x128xf32>, vector<8x128xf32>, vector<8x128xf32> -> vector<24x128xf32>
    %c1 = arith.constant 1 : index
    %c0_12 = arith.constant 0 : index
    %c0_13 = arith.constant 0 : index
    %35 = vector.load %arg2[%c1, %c0_12, %c0_13] : memref<6x8x24xf32, #tpu.memory_space<vmem>>, vector<1x8x24xf32>
    %36 = vector.shape_cast %35 : vector<1x8x24xf32> to vector<8x24xf32>
    %cst_14 = arith.constant dense<0.000000e+00> : vector<8x128xf32>
    %37 = tpu.matmul %36, %34, %cst_14 {dimension_numbers = #tpu.dot_dimension_numbers<[1], [0], [0], [1], [0, 0, 1, 1], [], []>} : vector<8x24xf32>, vector<24x128xf32>, vector<8x128xf32> -> vector<8x128xf32>
    %c1_15 = arith.constant 1 : index
    %c0_16 = arith.constant 0 : index
    %c0_17 = arith.constant 0 : index
    %38 = vector.load %arg3[%c1_15, %c0_16, %c0_17] : memref<6x8x1xf32, #tpu.memory_space<vmem>>, vector<1x8x1xf32>
    %39 = vector.shape_cast %38 : vector<1x8x1xf32> to vector<8x1xf32>
    %40 = vector.broadcast %39 : vector<8x1xf32> to vector<8x128xf32>
    %41 = arith.addf %37, %40 : vector<8x128xf32>
    %cst_18 = arith.constant 0.000000e+00 : f32
    %42 = vector.broadcast %cst_18 : f32 to vector<8x128xf32>
    %43 = arith.maximumf %41, %42 : vector<8x128xf32>
    %cst_19 = arith.constant 0.000000e+00 : f32
    %44 = vector.shape_cast %14 : vector<1x128xi1> to vector<1x128xi1>
    %45 = vector.broadcast %44 : vector<1x128xi1> to vector<8x128xi1>
    %46 = vector.broadcast %cst_19 : f32 to vector<8x128xf32>
    %47 = arith.select %45, %43, %46 : vector<8x128xi1>, vector<8x128xf32>
    %c1_i32_20 = arith.constant 1 : i32
    %48 = tpu.dynamic_rotate %47 by %c1_i32_20 dim 1 : vector<8x128xf32>, i32 -> vector<8x128xf32>
    %c127_i32_21 = arith.constant 127 : i32
    %49 = tpu.dynamic_rotate %47 by %c127_i32_21 dim 1 : vector<8x128xf32>, i32 -> vector<8x128xf32>
    %50 = tpu.concatenate %48, %47, %49 in 0 : vector<8x128xf32>, vector<8x128xf32>, vector<8x128xf32> -> vector<24x128xf32>
    %c2 = arith.constant 2 : index
    %c0_22 = arith.constant 0 : index
    %c0_23 = arith.constant 0 : index
    %51 = vector.load %arg2[%c2, %c0_22, %c0_23] : memref<6x8x24xf32, #tpu.memory_space<vmem>>, vector<1x8x24xf32>
    %52 = vector.shape_cast %51 : vector<1x8x24xf32> to vector<8x24xf32>
    %cst_24 = arith.constant dense<0.000000e+00> : vector<8x128xf32>
    %53 = tpu.matmul %52, %50, %cst_24 {dimension_numbers = #tpu.dot_dimension_numbers<[1], [0], [0], [1], [0, 0, 1, 1], [], []>} : vector<8x24xf32>, vector<24x128xf32>, vector<8x128xf32> -> vector<8x128xf32>
    %c2_25 = arith.constant 2 : index
    %c0_26 = arith.constant 0 : index
    %c0_27 = arith.constant 0 : index
    %54 = vector.load %arg3[%c2_25, %c0_26, %c0_27] : memref<6x8x1xf32, #tpu.memory_space<vmem>>, vector<1x8x1xf32>
    %55 = vector.shape_cast %54 : vector<1x8x1xf32> to vector<8x1xf32>
    %56 = vector.broadcast %55 : vector<8x1xf32> to vector<8x128xf32>
    %57 = arith.addf %53, %56 : vector<8x128xf32>
    %cst_28 = arith.constant 0.000000e+00 : f32
    %58 = vector.broadcast %cst_28 : f32 to vector<8x128xf32>
    %59 = arith.maximumf %57, %58 : vector<8x128xf32>
    %cst_29 = arith.constant 0.000000e+00 : f32
    %60 = vector.shape_cast %14 : vector<1x128xi1> to vector<1x128xi1>
    %61 = vector.broadcast %60 : vector<1x128xi1> to vector<8x128xi1>
    %62 = vector.broadcast %cst_29 : f32 to vector<8x128xf32>
    %63 = arith.select %61, %59, %62 : vector<8x128xi1>, vector<8x128xf32>
    %c1_i32_30 = arith.constant 1 : i32
    %64 = tpu.dynamic_rotate %63 by %c1_i32_30 dim 1 : vector<8x128xf32>, i32 -> vector<8x128xf32>
    %c127_i32_31 = arith.constant 127 : i32
    %65 = tpu.dynamic_rotate %63 by %c127_i32_31 dim 1 : vector<8x128xf32>, i32 -> vector<8x128xf32>
    %66 = tpu.concatenate %64, %63, %65 in 0 : vector<8x128xf32>, vector<8x128xf32>, vector<8x128xf32> -> vector<24x128xf32>
    %c3 = arith.constant 3 : index
    %c0_32 = arith.constant 0 : index
    %c0_33 = arith.constant 0 : index
    %67 = vector.load %arg2[%c3, %c0_32, %c0_33] : memref<6x8x24xf32, #tpu.memory_space<vmem>>, vector<1x8x24xf32>
    %68 = vector.shape_cast %67 : vector<1x8x24xf32> to vector<8x24xf32>
    %cst_34 = arith.constant dense<0.000000e+00> : vector<8x128xf32>
    %69 = tpu.matmul %68, %66, %cst_34 {dimension_numbers = #tpu.dot_dimension_numbers<[1], [0], [0], [1], [0, 0, 1, 1], [], []>} : vector<8x24xf32>, vector<24x128xf32>, vector<8x128xf32> -> vector<8x128xf32>
    %c3_35 = arith.constant 3 : index
    %c0_36 = arith.constant 0 : index
    %c0_37 = arith.constant 0 : index
    %70 = vector.load %arg3[%c3_35, %c0_36, %c0_37] : memref<6x8x1xf32, #tpu.memory_space<vmem>>, vector<1x8x1xf32>
    %71 = vector.shape_cast %70 : vector<1x8x1xf32> to vector<8x1xf32>
    %72 = vector.broadcast %71 : vector<8x1xf32> to vector<8x128xf32>
    %73 = arith.addf %69, %72 : vector<8x128xf32>
    %cst_38 = arith.constant 0.000000e+00 : f32
    %74 = vector.broadcast %cst_38 : f32 to vector<8x128xf32>
    %75 = arith.maximumf %73, %74 : vector<8x128xf32>
    %cst_39 = arith.constant 0.000000e+00 : f32
    %76 = vector.shape_cast %14 : vector<1x128xi1> to vector<1x128xi1>
    %77 = vector.broadcast %76 : vector<1x128xi1> to vector<8x128xi1>
    %78 = vector.broadcast %cst_39 : f32 to vector<8x128xf32>
    %79 = arith.select %77, %75, %78 : vector<8x128xi1>, vector<8x128xf32>
    %c1_i32_40 = arith.constant 1 : i32
    %80 = tpu.dynamic_rotate %79 by %c1_i32_40 dim 1 : vector<8x128xf32>, i32 -> vector<8x128xf32>
    %c127_i32_41 = arith.constant 127 : i32
    %81 = tpu.dynamic_rotate %79 by %c127_i32_41 dim 1 : vector<8x128xf32>, i32 -> vector<8x128xf32>
    %82 = tpu.concatenate %80, %79, %81 in 0 : vector<8x128xf32>, vector<8x128xf32>, vector<8x128xf32> -> vector<24x128xf32>
    %c4 = arith.constant 4 : index
    %c0_42 = arith.constant 0 : index
    %c0_43 = arith.constant 0 : index
    %83 = vector.load %arg2[%c4, %c0_42, %c0_43] : memref<6x8x24xf32, #tpu.memory_space<vmem>>, vector<1x8x24xf32>
    %84 = vector.shape_cast %83 : vector<1x8x24xf32> to vector<8x24xf32>
    %cst_44 = arith.constant dense<0.000000e+00> : vector<8x128xf32>
    %85 = tpu.matmul %84, %82, %cst_44 {dimension_numbers = #tpu.dot_dimension_numbers<[1], [0], [0], [1], [0, 0, 1, 1], [], []>} : vector<8x24xf32>, vector<24x128xf32>, vector<8x128xf32> -> vector<8x128xf32>
    %c4_45 = arith.constant 4 : index
    %c0_46 = arith.constant 0 : index
    %c0_47 = arith.constant 0 : index
    %86 = vector.load %arg3[%c4_45, %c0_46, %c0_47] : memref<6x8x1xf32, #tpu.memory_space<vmem>>, vector<1x8x1xf32>
    %87 = vector.shape_cast %86 : vector<1x8x1xf32> to vector<8x1xf32>
    %88 = vector.broadcast %87 : vector<8x1xf32> to vector<8x128xf32>
    %89 = arith.addf %85, %88 : vector<8x128xf32>
    %cst_48 = arith.constant 0.000000e+00 : f32
    %90 = vector.broadcast %cst_48 : f32 to vector<8x128xf32>
    %91 = arith.maximumf %89, %90 : vector<8x128xf32>
    %cst_49 = arith.constant 0.000000e+00 : f32
    %92 = vector.shape_cast %14 : vector<1x128xi1> to vector<1x128xi1>
    %93 = vector.broadcast %92 : vector<1x128xi1> to vector<8x128xi1>
    %94 = vector.broadcast %cst_49 : f32 to vector<8x128xf32>
    %95 = arith.select %93, %91, %94 : vector<8x128xi1>, vector<8x128xf32>
    %c1_i32_50 = arith.constant 1 : i32
    %96 = tpu.dynamic_rotate %95 by %c1_i32_50 dim 1 : vector<8x128xf32>, i32 -> vector<8x128xf32>
    %c127_i32_51 = arith.constant 127 : i32
    %97 = tpu.dynamic_rotate %95 by %c127_i32_51 dim 1 : vector<8x128xf32>, i32 -> vector<8x128xf32>
    %98 = tpu.concatenate %96, %95, %97 in 0 : vector<8x128xf32>, vector<8x128xf32>, vector<8x128xf32> -> vector<24x128xf32>
    %c5 = arith.constant 5 : index
    %c0_52 = arith.constant 0 : index
    %c0_53 = arith.constant 0 : index
    %99 = vector.load %arg2[%c5, %c0_52, %c0_53] : memref<6x8x24xf32, #tpu.memory_space<vmem>>, vector<1x8x24xf32>
    %100 = vector.shape_cast %99 : vector<1x8x24xf32> to vector<8x24xf32>
    %cst_54 = arith.constant dense<0.000000e+00> : vector<8x128xf32>
    %101 = tpu.matmul %100, %98, %cst_54 {dimension_numbers = #tpu.dot_dimension_numbers<[1], [0], [0], [1], [0, 0, 1, 1], [], []>} : vector<8x24xf32>, vector<24x128xf32>, vector<8x128xf32> -> vector<8x128xf32>
    %c5_55 = arith.constant 5 : index
    %c0_56 = arith.constant 0 : index
    %c0_57 = arith.constant 0 : index
    %102 = vector.load %arg3[%c5_55, %c0_56, %c0_57] : memref<6x8x1xf32, #tpu.memory_space<vmem>>, vector<1x8x1xf32>
    %103 = vector.shape_cast %102 : vector<1x8x1xf32> to vector<8x1xf32>
    %104 = vector.broadcast %103 : vector<8x1xf32> to vector<8x128xf32>
    %105 = arith.addf %101, %104 : vector<8x128xf32>
    %c0_58 = arith.constant 0 : index
    %c0_59 = arith.constant 0 : index
    %106 = vector.load %arg4[%c0_58, %c0_59] : memref<8x128xf32, #tpu.memory_space<vmem>>, vector<8x128xf32>
    tpu.vector_store %arg4[%c0_58, %c0_59], %105 {strides = array<i32>} : memref<8x128xf32, #tpu.memory_space<vmem>>, vector<8x128xf32>,
    return
  }
  func.func @transform_0(%arg0: i32) -> (i32, i32) {
    %c0_i32 = arith.constant 0 : i32
    %c0_i32_0 = arith.constant 0 : i32
    %c0_i32_1 = arith.constant 0 : i32
    return %c0_i32, %c0_i32_0 : i32, i32
  }
  func.func @transform_1(%arg0: i32) -> (i32, i32, i32) {
    %c0_i32 = arith.constant 0 : i32
    %c0_i32_0 = arith.constant 0 : i32
    %c0_i32_1 = arith.constant 0 : i32
    %c0_i32_2 = arith.constant 0 : i32
    return %c0_i32, %c0_i32_0, %c0_i32_1 : i32, i32, i32
  }
  func.func @transform_2(%arg0: i32) -> (i32, i32, i32) {
    %c0_i32 = arith.constant 0 : i32
    %c0_i32_0 = arith.constant 0 : i32
    %c0_i32_1 = arith.constant 0 : i32
    %c0_i32_2 = arith.constant 0 : i32
    return %c0_i32, %c0_i32_0, %c0_i32_1 : i32, i32, i32
  }
  func.func @transform_3(%arg0: i32) -> (i32, i32) {
    %c0_i32 = arith.constant 0 : i32
    %c0_i32_0 = arith.constant 0 : i32
    %c0_i32_1 = arith.constant 0 : i32
    return %c0_i32, %c0_i32_0 : i32, i32
  }
}

</mosaic_0001>

<llo_original>
// kernel: cae1d_forward.1
$region0: #{cae1d_forward.1}
  #allocation0 [shape = 'u32[]', space=smem, size = 0x4, offset = 0x4, fixed_abs, tag = 'smem constant byte address 0x4 - core index']
  #allocation1 [shape = 'u32[144,128]{1,0:T(1,128)}', space=vmem, size = 0x12000, scoped, tag = 'internal scratch']
  %s0 = inlined_call_operand.vmem [shape: f32[8,128], index: 0, kind: input, shape index: {}]
  %s1 = inlined_call_operand.vmem [shape: f32[6,8,24], index: 1, kind: input, shape index: {}]
  %s2 = inlined_call_operand.vmem [shape: f32[6,8,1], index: 2, kind: input, shape index: {}]
  %s3 = inlined_call_operand.vmem [shape: f32[8,128], index: 3, kind: output, shape index: {}]
  %s4 = sld [smem:[#allocation0]]
  $region22: #{cae1d_forward.1} parent=0
    _
  %s6 = ssub.s32 1, %s4
  %s7 = scalar_select 0, %s6, %s4
  // Predicated region
  $region2: #{cae1d_forward.1} parent=0 // pred_check
    _
  $region3: #{cae1d_forward.1} parent=0 // pred_check_branch
    %9 = sbr.rel (0) target = $region5
  $region4: #{cae1d_forward.1} parent=0 // pred_region
    _
  $region5: #{cae1d_forward.1} parent=0 // pred_fallthru
    _
  // Predicated region
  $region6: #{cae1d_forward.1} parent=0 // pred_check
    _
  $region7: #{cae1d_forward.1} parent=0 // pred_check_branch
    %11 = sbr.rel (0) target = $region9
  $region8: #{cae1d_forward.1} parent=0 // pred_region
    _
  $region9: #{cae1d_forward.1} parent=0 // pred_fallthru
    _
  // Predicated region
  $region10: #{cae1d_forward.1} parent=0 // pred_check
    _
  $region11: #{cae1d_forward.1} parent=0 // pred_check_branch
    %13 = sbr.rel (0) target = $region13
  $region12: #{cae1d_forward.1} parent=0 // pred_region
    _
  $region13: #{cae1d_forward.1} parent=0 // pred_fallthru
    _
  %v14 = vlaneseq
  %v15 = vand.u32 %v14, 127
  %vm16 = vcmp.lt.s32.totalorder %v15, 0
  %vm17 = vcmp.ge.s32.totalorder %v15, 0
  %vm18 = vcmp.lt.s32.totalorder %v15, 16
  %vm19 = vmand %vm17, %vm18
  %vm20 = vmor %vm16, %vm19
  %vm21 = vcmp.ge.s32.totalorder %v15, 17
  %vm22 = vcmp.lt.s32.totalorder %v15, 33
  %vm23 = vmand %vm21, %vm22
  %vm24 = vmor %vm20, %vm23
  %v25 = vld [vmem:[%s0] sm:$0xff]
  %26 = vrot.lane.b32.xlu0 %v25, 1
  %v27 = vpop.permute.xlu0 %26
  %28 = vrot.lane.b32.xlu0 %v25, 127
  %v29 = vpop.permute.xlu0 %28
  %v30 = vld [vmem:[%s1] sm:$0xff]
  %v31 = vld [vmem:[%s2] sm:$0xff]
  %33 = vset.pattern.permute.xlu0 0
  %34 = vperm.xlu0 %33, %v31
  %v35 = vpop.permute.xlu0 %34
  %vm37 = vcmask 195584
  %v39 = vsel %vm37, %v30, 0
  %41 = vmatprep.subr.mxu0 0.0
  %42 = vmatpush1.msra.mxu0 %v27
  %43 = vmatprep.subr.mxu0 0.0
  %44 = vmatpush1.msra.mxu0 %v25
  %45 = vmatprep.subr.mxu0 0.0
  %46 = vmatpush1.msra.mxu0 %v29
  %47 = vmatprep.subr.mxu0 0.0
  %48 = vmatpush1.msra.mxu0 0.0
  %49 = vmatprep.subr.mxu0 0.0
  %50 = vmatpush1.msra.mxu0 0.0
  %51 = vmatprep.subr.mxu0 0.0
  %52 = vmatpush1.msra.mxu0 0.0
  %53 = vmatprep.subr.mxu0 0.0
  %54 = vmatpush1.msra.mxu0 0.0
  %55 = vmatprep.subr.mxu0 0.0
  %56 = vmatpush1.msra.mxu0 0.0
  %57 = vmatprep.subr.mxu0 0.0
  %58 = vmatpush1.msra.mxu0 0.0
  %59 = vmatprep.subr.mxu0 0.0
  %60 = vmatpush1.msra.mxu0 0.0
  %61 = vmatprep.subr.mxu0 0.0
  %62 = vmatpush1.msra.mxu0 0.0
  %63 = vmatprep.subr.mxu0 0.0
  %64 = vmatpush1.msra.mxu0 0.0
  %65 = vmatprep.subr.mxu0 0.0
  %66 = vmatpush1.msra.mxu0 0.0
  %67 = vmatprep.subr.mxu0 0.0
  %68 = vmatpush1.msra.mxu0 0.0
  %69 = vmatprep.subr.mxu0 0.0
  %70 = vmatpush1.msra.mxu0 0.0
  %71 = vmatprep.subr.mxu0 0.0
  %72 = vmatpush1.msra.mxu0 0.0
  %73 = vmatprep.subr.mxu0 0.0
  %74 = vmatpush1.msra.mxu0 0.0
  %75 = vmatprep.subr.mxu0 0.0
  %76 = vmatpush1.msra.mxu0 0.0
  %77 = vmatprep.subr.mxu0 0.0
  %78 = vmatpush1.msra.mxu0 0.0
  %79 = vmatprep.subr.mxu0 0.0
  %80 = vmatpush1.msra.mxu0 0.0
  %81 = vmatprep.subr.mxu0 0.0
  %82 = vmatpush1.msra.mxu0 0.0
  %83 = vmatprep.subr.mxu0 0.0
  %84 = vmatpush1.msra.mxu0 0.0
  %85 = vmatprep.subr.mxu0 0.0
  %86 = vmatpush1.msra.mxu0 0.0
  %87 = vmatprep.subr.mxu0 0.0
  %88 = vmatpush1.msra.mxu0 0.0
  %89 = vmatprep.subr.mxu0 0.0
  %90 = vmatpush1.msra.mxu0 0.0
  %91 = vmatprep.subr.mxu0 0.0
  %92 = vmatpush1.msra.mxu0 0.0
  %93 = vmatprep.subr.mxu0 0.0
  %94 = vmatpush1.msra.mxu0 0.0
  %95 = vmatprep.subr.mxu0 0.0
  %96 = vmatpush1.msra.mxu0 0.0
  %97 = vmatprep.subr.mxu0 0.0
  %98 = vmatpush1.msra.mxu0 0.0
  %99 = vmatprep.subr.mxu0 0.0
  %100 = vmatpush1.msra.mxu0 0.0
  %101 = vmatprep.subr.mxu0 0.0
  %102 = vmatpush1.msra.mxu0 0.0
  %103 = vmatprep.subr.mxu0 0.0
  %104 = vmatpush1.msra.mxu0 0.0
  %105 = vmatprep.mubr.f32.mxu0 0.0
  %106 = vmatmul.mubr.f32.gmra.mrb[0].mxu0 %v39
  %v107 = vpop.f32.mrb[0].mxu0
  %v108 = vadd.f32 %v35, %v107
  %v109 = vpop.f32.mrb[0].mxu0
  %110 = vdwg.mxu0
  %v111 = vmax.f32 %v108, 0.0
  %v112 = vsel %vm24, 1, 0
  %vm113 = vcmp.eq.s32.totalorder %v112, 1
  %v114 = vsel %vm113, %v111, 0.0
  %115 = vrot.lane.b32.xlu0 %v114, 1
  %v116 = vpop.permute.xlu0 %115
  %117 = vrot.lane.b32.xlu0 %v114, 127
  %v118 = vpop.permute.xlu0 %117
  %s119 = scalar_lea.vmem %s1, 8
  %v120 = vld [vmem:[%s119] sm:$0xff]
  %s121 = scalar_lea.vmem %s2, 8
  %v122 = vld [vmem:[%s121] sm:$0xff]
  %124 = vset.pattern.permute.xlu0 0
  %125 = vperm.xlu0 %124, %v122
  %v126 = vpop.permute.xlu0 %125
  %v129 = vsel %vm37, %v120, 0
  %131 = vmatprep.subr.mxu0 0.0
  %132 = vmatpush1.msra.mxu0 %v116
  %133 = vmatprep.subr.mxu0 0.0
  %134 = vmatpush1.msra.mxu0 %v114
  %135 = vmatprep.subr.mxu0 0.0
  %136 = vmatpush1.msra.mxu0 %v118
  %137 = vmatprep.subr.mxu0 0.0
  %138 = vmatpush1.msra.mxu0 0.0
  %139 = vmatprep.subr.mxu0 0.0
  %140 = vmatpush1.msra.mxu0 0.0
  %141 = vmatprep.subr.mxu0 0.0
  %142 = vmatpush1.msra.mxu0 0.0
  %143 = vmatprep.subr.mxu0 0.0
  %144 = vmatpush1.msra.mxu0 0.0
  %145 = vmatprep.subr.mxu0 0.0
  %146 = vmatpush1.msra.mxu0 0.0
  %147 = vmatprep.subr.mxu0 0.0
  %148 = vmatpush1.msra.mxu0 0.0
  %149 = vmatprep.subr.mxu0 0.0
  %150 = vmatpush1.msra.mxu0 0.0
  %151 = vmatprep.subr.mxu0 0.0
  %152 = vmatpush1.msra.mxu0 0.0
  %153 = vmatprep.subr.mxu0 0.0
  %154 = vmatpush1.msra.mxu0 0.0
  %155 = vmatprep.subr.mxu0 0.0
  %156 = vmatpush1.msra.mxu0 0.0
  %157 = vmatprep.subr.mxu0 0.0
  %158 = vmatpush1.msra.mxu0 0.0
  %159 = vmatprep.subr.mxu0 0.0
  %160 = vmatpush1.msra.mxu0 0.0
  %161 = vmatprep.subr.mxu0 0.0
  %162 = vmatpush1.msra.mxu0 0.0
  %163 = vmatprep.subr.mxu0 0.0
  %164 = vmatpush1.msra.mxu0 0.0
  %165 = vmatprep.subr.mxu0 0.0
  %166 = vmatpush1.msra.mxu0 0.0
  %167 = vmatprep.subr.mxu0 0.0
  %168 = vmatpush1.msra.mxu0 0.0
  %169 = vmatprep.subr.mxu0 0.0
  %170 = vmatpush1.msra.mxu0 0.0
  %171 = vmatprep.subr.mxu0 0.0
  %172 = vmatpush1.msra.mxu0 0.0
  %173 = vmatprep.subr.mxu0 0.0
  %174 = vmatpush1.msra.mxu0 0.0
  %175 = vmatprep.subr.mxu0 0.0
  %176 = vmatpush1.msra.mxu0 0.0
  %177 = vmatprep.subr.mxu0 0.0
  %178 = vmatpush1.msra.mxu0 0.0
  %179 = vmatprep.subr.mxu0 0.0
  %180 = vmatpush1.msra.mxu0 0.0
  %181 = vmatprep.subr.mxu0 0.0
  %182 = vmatpush1.msra.mxu0 0.0
  %183 = vmatprep.subr.mxu0 0.0
  %184 = vmatpush1.msra.mxu0 0.0
  %185 = vmatprep.subr.mxu0 0.0
  %186 = vmatpush1.msra.mxu0 0.0
  %187 = vmatprep.subr.mxu0 0.0
  %188 = vmatpush1.msra.mxu0 0.0
  %189 = vmatprep.subr.mxu0 0.0
  %190 = vmatpush1.msra.mxu0 0.0
  %191 = vmatprep.subr.mxu0 0.0
  %192 = vmatpush1.msra.mxu0 0.0
  %193 = vmatprep.subr.mxu0 0.0
  %194 = vmatpush1.msra.mxu0 0.0
  %195 = vmatprep.mubr.f32.mxu0 0.0
  %196 = vmatmul.mubr.f32.gmra.mrb[0].mxu0 %v129
  %v197 = vpop.f32.mrb[0].mxu0
  %v198 = vadd.f32 %v126, %v197
  %v199 = vpop.f32.mrb[0].mxu0
  %200 = vdwg.mxu0
  %v201 = vmax.f32 %v198, 0.0
  %v202 = vsel %vm113, %v201, 0.0
  %203 = vrot.lane.b32.xlu0 %v202, 1
  %v204 = vpop.permute.xlu0 %203
  %205 = vrot.lane.b32.xlu0 %v202, 127
  %v206 = vpop.permute.xlu0 %205
  %s207 = scalar_lea.vmem %s1, 16
  %v208 = vld [vmem:[%s207] sm:$0xff]
  %s209 = scalar_lea.vmem %s2, 16
  %v210 = vld [vmem:[%s209] sm:$0xff]
  %212 = vset.pattern.permute.xlu0 0
  %213 = vperm.xlu0 %212, %v210
  %v214 = vpop.permute.xlu0 %213
  %v217 = vsel %vm37, %v208, 0
  %219 = vmatprep.subr.mxu0 0.0
  %220 = vmatpush1.msra.mxu0 %v204
  %221 = vmatprep.subr.mxu0 0.0
  %222 = vmatpush1.msra.mxu0 %v202
  %223 = vmatprep.subr.mxu0 0.0
  %224 = vmatpush1.msra.mxu0 %v206
  %225 = vmatprep.subr.mxu0 0.0
  %226 = vmatpush1.msra.mxu0 0.0
  %227 = vmatprep.subr.mxu0 0.0
  %228 = vmatpush1.msra.mxu0 0.0
  %229 = vmatprep.subr.mxu0 0.0
  %230 = vmatpush1.msra.mxu0 0.0
  %231 = vmatprep.subr.mxu0 0.0
  %232 = vmatpush1.msra.mxu0 0.0
  %233 = vmatprep.subr.mxu0 0.0
  %234 = vmatpush1.msra.mxu0 0.0
  %235 = vmatprep.subr.mxu0 0.0
  %236 = vmatpush1.msra.mxu0 0.0
  %237 = vmatprep.subr.mxu0 0.0
  %238 = vmatpush1.msra.mxu0 0.0
  %239 = vmatprep.subr.mxu0 0.0
  %240 = vmatpush1.msra.mxu0 0.0
  %241 = vmatprep.subr.mxu0 0.0
  %242 = vmatpush1.msra.mxu0 0.0
  %243 = vmatprep.subr.mxu0 0.0
  %244 = vmatpush1.msra.mxu0 0.0
  %245 = vmatprep.subr.mxu0 0.0
  %246 = vmatpush1.msra.mxu0 0.0
  %247 = vmatprep.subr.mxu0 0.0
  %248 = vmatpush1.msra.mxu0 0.0
  %249 = vmatprep.subr.mxu0 0.0
  %250 = vmatpush1.msra.mxu0 0.0
  %251 = vmatprep.subr.mxu0 0.0
  %252 = vmatpush1.msra.mxu0 0.0
  %253 = vmatprep.subr.mxu0 0.0
  %254 = vmatpush1.msra.mxu0 0.0
  %255 = vmatprep.subr.mxu0 0.0
  %256 = vmatpush1.msra.mxu0 0.0
  %257 = vmatprep.subr.mxu0 0.0
  %258 = vmatpush1.msra.mxu0 0.0
  %259 = vmatprep.subr.mxu0 0.0
  %260 = vmatpush1.msra.mxu0 0.0
  %261 = vmatprep.subr.mxu0 0.0
  %262 = vmatpush1.msra.mxu0 0.0
  %263 = vmatprep.subr.mxu0 0.0
  %264 = vmatpush1.msra.mxu0 0.0
  %265 = vmatprep.subr.mxu0 0.0
  %266 = vmatpush1.msra.mxu0 0.0
  %267 = vmatprep.subr.mxu0 0.0
  %268 = vmatpush1.msra.mxu0 0.0
  %269 = vmatprep.subr.mxu0 0.0
  %270 = vmatpush1.msra.mxu0 0.0
  %271 = vmatprep.subr.mxu0 0.0
  %272 = vmatpush1.msra.mxu0 0.0
  %273 = vmatprep.subr.mxu0 0.0
  %274 = vmatpush1.msra.mxu0 0.0
  %275 = vmatprep.subr.mxu0 0.0
  %276 = vmatpush1.msra.mxu0 0.0
  %277 = vmatprep.subr.mxu0 0.0
  %278 = vmatpush1.msra.mxu0 0.0
  %279 = vmatprep.subr.mxu0 0.0
  %280 = vmatpush1.msra.mxu0 0.0
  %281 = vmatprep.subr.mxu0 0.0
  %282 = vmatpush1.msra.mxu0 0.0
  %283 = vmatprep.mubr.f32.mxu0 0.0
  %284 = vmatmul.mubr.f32.gmra.mrb[0].mxu0 %v217
  %v285 = vpop.f32.mrb[0].mxu0
  %v286 = vadd.f32 %v214, %v285
  %v287 = vpop.f32.mrb[0].mxu0
  %288 = vdwg.mxu0
  %v289 = vmax.f32 %v286, 0.0
  %v290 = vsel %vm113, %v289, 0.0
  %291 = vrot.lane.b32.xlu0 %v290, 1
  %v292 = vpop.permute.xlu0 %291
  %293 = vrot.lane.b32.xlu0 %v290, 127
  %v294 = vpop.permute.xlu0 %293
  %s295 = scalar_lea.vmem %s1, 24
  %v296 = vld [vmem:[%s295] sm:$0xff]
  %s297 = scalar_lea.vmem %s2, 24
  %v298 = vld [vmem:[%s297] sm:$0xff]
  %300 = vset.pattern.permute.xlu0 0
  %301 = vperm.xlu0 %300, %v298
  %v302 = vpop.permute.xlu0 %301
  %v305 = vsel %vm37, %v296, 0
  %307 = vmatprep.subr.mxu0 0.0
  %308 = vmatpush1.msra.mxu0 %v292
  %309 = vmatprep.subr.mxu0 0.0
  %310 = vmatpush1.msra.mxu0 %v290
  %311 = vmatprep.subr.mxu0 0.0
  %312 = vmatpush1.msra.mxu0 %v294
  %313 = vmatprep.subr.mxu0 0.0
  %314 = vmatpush1.msra.mxu0 0.0
  %315 = vmatprep.subr.mxu0 0.0
  %316 = vmatpush1.msra.mxu0 0.0
  %317 = vmatprep.subr.mxu0 0.0
  %318 = vmatpush1.msra.mxu0 0.0
  %319 = vmatprep.subr.mxu0 0.0
  %320 = vmatpush1.msra.mxu0 0.0
  %321 = vmatprep.subr.mxu0 0.0
  %322 = vmatpush1.msra.mxu0 0.0
  %323 = vmatprep.subr.mxu0 0.0
  %324 = vmatpush1.msra.mxu0 0.0
  %325 = vmatprep.subr.mxu0 0.0
  %326 = vmatpush1.msra.mxu0 0.0
  %327 = vmatprep.subr.mxu0 0.0
  %328 = vmatpush1.msra.mxu0 0.0
  %329 = vmatprep.subr.mxu0 0.0
  %330 = vmatpush1.msra.mxu0 0.0
  %331 = vmatprep.subr.mxu0 0.0
  %332 = vmatpush1.msra.mxu0 0.0
  %333 = vmatprep.subr.mxu0 0.0
  %334 = vmatpush1.msra.mxu0 0.0
  %335 = vmatprep.subr.mxu0 0.0
  %336 = vmatpush1.msra.mxu0 0.0
  %337 = vmatprep.subr.mxu0 0.0
  %338 = vmatpush1.msra.mxu0 0.0
  %339 = vmatprep.subr.mxu0 0.0
  %340 = vmatpush1.msra.mxu0 0.0
  %341 = vmatprep.subr.mxu0 0.0
  %342 = vmatpush1.msra.mxu0 0.0
  %343 = vmatprep.subr.mxu0 0.0
  %344 = vmatpush1.msra.mxu0 0.0
  %345 = vmatprep.subr.mxu0 0.0
  %346 = vmatpush1.msra.mxu0 0.0
  %347 = vmatprep.subr.mxu0 0.0
  %348 = vmatpush1.msra.mxu0 0.0
  %349 = vmatprep.subr.mxu0 0.0
  %350 = vmatpush1.msra.mxu0 0.0
  %351 = vmatprep.subr.mxu0 0.0
  %352 = vmatpush1.msra.mxu0 0.0
  %353 = vmatprep.subr.mxu0 0.0
  %354 = vmatpush1.msra.mxu0 0.0
  %355 = vmatprep.subr.mxu0 0.0
  %356 = vmatpush1.msra.mxu0 0.0
  %357 = vmatprep.subr.mxu0 0.0
  %358 = vmatpush1.msra.mxu0 0.0
  %359 = vmatprep.subr.mxu0 0.0
  %360 = vmatpush1.msra.mxu0 0.0
  %361 = vmatprep.subr.mxu0 0.0
  %362 = vmatpush1.msra.mxu0 0.0
  %363 = vmatprep.subr.mxu0 0.0
  %364 = vmatpush1.msra.mxu0 0.0
  %365 = vmatprep.subr.mxu0 0.0
  %366 = vmatpush1.msra.mxu0 0.0
  %367 = vmatprep.subr.mxu0 0.0
  %368 = vmatpush1.msra.mxu0 0.0
  %369 = vmatprep.subr.mxu0 0.0
  %370 = vmatpush1.msra.mxu0 0.0
  %371 = vmatprep.mubr.f32.mxu0 0.0
  %372 = vmatmul.mubr.f32.gmra.mrb[0].mxu0 %v305
  %v373 = vpop.f32.mrb[0].mxu0
  %v374 = vadd.f32 %v302, %v373
  %v375 = vpop.f32.mrb[0].mxu0
  %376 = vdwg.mxu0
  %v377 = vmax.f32 %v374, 0.0
  %v378 = vsel %vm113, %v377, 0.0
  %379 = vrot.lane.b32.xlu0 %v378, 1
  %v380 = vpop.permute.xlu0 %379
  %381 = vrot.lane.b32.xlu0 %v378, 127
  %v382 = vpop.permute.xlu0 %381
  %s383 = scalar_lea.vmem %s1, 32
  %v384 = vld [vmem:[%s383] sm:$0xff]
  %s385 = scalar_lea.vmem %s2, 32
  %v386 = vld [vmem:[%s385] sm:$0xff]
  %388 = vset.pattern.permute.xlu0 0
  %389 = vperm.xlu0 %388, %v386
  %v390 = vpop.permute.xlu0 %389
  %v393 = vsel %vm37, %v384, 0
  %395 = vmatprep.subr.mxu0 0.0
  %396 = vmatpush1.msra.mxu0 %v380
  %397 = vmatprep.subr.mxu0 0.0
  %398 = vmatpush1.msra.mxu0 %v378
  %399 = vmatprep.subr.mxu0 0.0
  %400 = vmatpush1.msra.mxu0 %v382
  %401 = vmatprep.subr.mxu0 0.0
  %402 = vmatpush1.msra.mxu0 0.0
  %403 = vmatprep.subr.mxu0 0.0
  %404 = vmatpush1.msra.mxu0 0.0
  %405 = vmatprep.subr.mxu0 0.0
  %406 = vmatpush1.msra.mxu0 0.0
  %407 = vmatprep.subr.mxu0 0.0
  %408 = vmatpush1.msra.mxu0 0.0
  %409 = vmatprep.subr.mxu0 0.0
  %410 = vmatpush1.msra.mxu0 0.0
  %411 = vmatprep.subr.mxu0 0.0
  %412 = vmatpush1.msra.mxu0 0.0
  %413 = vmatprep.subr.mxu0 0.0
  %414 = vmatpush1.msra.mxu0 0.0
  %415 = vmatprep.subr.mxu0 0.0
  %416 = vmatpush1.msra.mxu0 0.0
  %417 = vmatprep.subr.mxu0 0.0
  %418 = vmatpush1.msra.mxu0 0.0
  %419 = vmatprep.subr.mxu0 0.0
  %420 = vmatpush1.msra.mxu0 0.0
  %421 = vmatprep.subr.mxu0 0.0
  %422 = vmatpush1.msra.mxu0 0.0
  %423 = vmatprep.subr.mxu0 0.0
  %424 = vmatpush1.msra.mxu0 0.0
  %425 = vmatprep.subr.mxu0 0.0
  %426 = vmatpush1.msra.mxu0 0.0
  %427 = vmatprep.subr.mxu0 0.0
  %428 = vmatpush1.msra.mxu0 0.0
  %429 = vmatprep.subr.mxu0 0.0
  %430 = vmatpush1.msra.mxu0 0.0
  %431 = vmatprep.subr.mxu0 0.0
  %432 = vmatpush1.msra.mxu0 0.0
  %433 = vmatprep.subr.mxu0 0.0
  %434 = vmatpush1.msra.mxu0 0.0
  %435 = vmatprep.subr.mxu0 0.0
  %436 = vmatpush1.msra.mxu0 0.0
  %437 = vmatprep.subr.mxu0 0.0
  %438 = vmatpush1.msra.mxu0 0.0
  %439 = vmatprep.subr.mxu0 0.0
  %440 = vmatpush1.msra.mxu0 0.0
  %441 = vmatprep.subr.mxu0 0.0
  %442 = vmatpush1.msra.mxu0 0.0
  %443 = vmatprep.subr.mxu0 0.0
  %444 = vmatpush1.msra.mxu0 0.0
  %445 = vmatprep.subr.mxu0 0.0
  %446 = vmatpush1.msra.mxu0 0.0
  %447 = vmatprep.subr.mxu0 0.0
  %448 = vmatpush1.msra.mxu0 0.0
  %449 = vmatprep.subr.mxu0 0.0
  %450 = vmatpush1.msra.mxu0 0.0
  %451 = vmatprep.subr.mxu0 0.0
  %452 = vmatpush1.msra.mxu0 0.0
  %453 = vmatprep.subr.mxu0 0.0
  %454 = vmatpush1.msra.mxu0 0.0
  %455 = vmatprep.subr.mxu0 0.0
  %456 = vmatpush1.msra.mxu0 0.0
  %457 = vmatprep.subr.mxu0 0.0
  %458 = vmatpush1.msra.mxu0 0.0
  %459 = vmatprep.mubr.f32.mxu0 0.0
  %460 = vmatmul.mubr.f32.gmra.mrb[0].mxu0 %v393
  %v461 = vpop.f32.mrb[0].mxu0
  %v462 = vadd.f32 %v390, %v461
  %v463 = vpop.f32.mrb[0].mxu0
  %464 = vdwg.mxu0
  %v465 = vmax.f32 %v462, 0.0
  %v466 = vsel %vm113, %v465, 0.0
  %467 = vrot.lane.b32.xlu0 %v466, 1
  %v468 = vpop.permute.xlu0 %467
  %469 = vrot.lane.b32.xlu0 %v466, 127
  %v470 = vpop.permute.xlu0 %469
  %s471 = scalar_lea.vmem %s1, 40
  %v472 = vld [vmem:[%s471] sm:$0xff]
  %s473 = scalar_lea.vmem %s2, 40
  %v474 = vld [vmem:[%s473] sm:$0xff]
  %476 = vset.pattern.permute.xlu0 0
  %477 = vperm.xlu0 %476, %v474
  %v478 = vpop.permute.xlu0 %477
  %v481 = vsel %vm37, %v472, 0
  %483 = vmatprep.subr.mxu0 0.0
  %484 = vmatpush1.msra.mxu0 %v468
  %485 = vmatprep.subr.mxu0 0.0
  %486 = vmatpush1.msra.mxu0 %v466
  %487 = vmatprep.subr.mxu0 0.0
  %488 = vmatpush1.msra.mxu0 %v470
  %489 = vmatprep.subr.mxu0 0.0
  %490 = vmatpush1.msra.mxu0 0.0
  %491 = vmatprep.subr.mxu0 0.0
  %492 = vmatpush1.msra.mxu0 0.0
  %493 = vmatprep.subr.mxu0 0.0
  %494 = vmatpush1.msra.mxu0 0.0
  %495 = vmatprep.subr.mxu0 0.0
  %496 = vmatpush1.msra.mxu0 0.0
  %497 = vmatprep.subr.mxu0 0.0
  %498 = vmatpush1.msra.mxu0 0.0
  %499 = vmatprep.subr.mxu0 0.0
  %500 = vmatpush1.msra.mxu0 0.0
  %501 = vmatprep.subr.mxu0 0.0
  %502 = vmatpush1.msra.mxu0 0.0
  %503 = vmatprep.subr.mxu0 0.0
  %504 = vmatpush1.msra.mxu0 0.0
  %505 = vmatprep.subr.mxu0 0.0
  %506 = vmatpush1.msra.mxu0 0.0
  %507 = vmatprep.subr.mxu0 0.0
  %508 = vmatpush1.msra.mxu0 0.0
  %509 = vmatprep.subr.mxu0 0.0
  %510 = vmatpush1.msra.mxu0 0.0
  %511 = vmatprep.subr.mxu0 0.0
  %512 = vmatpush1.msra.mxu0 0.0
  %513 = vmatprep.subr.mxu0 0.0
  %514 = vmatpush1.msra.mxu0 0.0
  %515 = vmatprep.subr.mxu0 0.0
  %516 = vmatpush1.msra.mxu0 0.0
  %517 = vmatprep.subr.mxu0 0.0
  %518 = vmatpush1.msra.mxu0 0.0
  %519 = vmatprep.subr.mxu0 0.0
  %520 = vmatpush1.msra.mxu0 0.0
  %521 = vmatprep.subr.mxu0 0.0
  %522 = vmatpush1.msra.mxu0 0.0
  %523 = vmatprep.subr.mxu0 0.0
  %524 = vmatpush1.msra.mxu0 0.0
  %525 = vmatprep.subr.mxu0 0.0
  %526 = vmatpush1.msra.mxu0 0.0
  %527 = vmatprep.subr.mxu0 0.0
  %528 = vmatpush1.msra.mxu0 0.0
  %529 = vmatprep.subr.mxu0 0.0
  %530 = vmatpush1.msra.mxu0 0.0
  %531 = vmatprep.subr.mxu0 0.0
  %532 = vmatpush1.msra.mxu0 0.0
  %533 = vmatprep.subr.mxu0 0.0
  %534 = vmatpush1.msra.mxu0 0.0
  %535 = vmatprep.subr.mxu0 0.0
  %536 = vmatpush1.msra.mxu0 0.0
  %537 = vmatprep.subr.mxu0 0.0
  %538 = vmatpush1.msra.mxu0 0.0
  %539 = vmatprep.subr.mxu0 0.0
  %540 = vmatpush1.msra.mxu0 0.0
  %541 = vmatprep.subr.mxu0 0.0
  %542 = vmatpush1.msra.mxu0 0.0
  %543 = vmatprep.subr.mxu0 0.0
  %544 = vmatpush1.msra.mxu0 0.0
  %545 = vmatprep.subr.mxu0 0.0
  %546 = vmatpush1.msra.mxu0 0.0
  %547 = vmatprep.mubr.f32.mxu0 0.0
  %548 = vmatmul.mubr.f32.gmra.mrb[0].mxu0 %v481
  %v549 = vpop.f32.mrb[0].mxu0
  %v550 = vadd.f32 %v478, %v549
  %v551 = vpop.f32.mrb[0].mxu0
  %552 = vdwg.mxu0
  %553 = vst [vmem:[%s3] sm:$0xff] %v550
  // Predicated region
  $region14: #{cae1d_forward.1} parent=0 // pred_check
    _
  $region15: #{cae1d_forward.1} parent=0 // pred_check_branch
    %555 = sbr.rel (0) target = $region17
  $region16: #{cae1d_forward.1} parent=0 // pred_region
    _
  $region17: #{cae1d_forward.1} parent=0 // pred_fallthru
    _
  // Predicated region
  $region18: #{cae1d_forward.1} parent=0 // pred_check
    _
  $region19: #{cae1d_forward.1} parent=0 // pred_check_branch
    %557 = sbr.rel (0) target = $region21
  $region20: #{cae1d_forward.1} parent=0 // pred_region
    _
  $region21: #{cae1d_forward.1} parent=0 // pred_fallthru
    _

</llo_original>
